<compile_context>
chip_gen: v5e
topology: v5e:2x2
jax: 0.10.0
libtpu: 0.0.40
codegen_flags: <defaults>
</compile_context>

<pallas_src>
import functools

import jax
import jax.numpy as jnp
from jax import lax
from jax.experimental import pallas as pl
from jax.experimental.pallas import tpu as pltpu


def _qkv_proj_kernel(x_ref, w_ref, b_ref, qkv_ref):
    # x_ref: (1, Ts, E) input tile;  w_ref: (1, E, Dh) one Dh-wide column block
    # of [Wq*scale | Wk | Wv]^T;  b_ref: (1, 1, Dh) matching f32 bias block;
    # qkv_ref: (1, 1, Ts, Dh) head-major output block.
    y = jnp.dot(x_ref[0], w_ref[0], preferred_element_type=jnp.float32) + b_ref[0]
    qkv_ref[0, 0] = y.astype(qkv_ref.dtype)


def _flash_attn_outproj_kernel(q_ref, k_ref, v_ref, wo_ref, bo_ref, o_ref,
                               oacc_scr, *, kv_chunk):
    # q_ref: (1, 1, Tq, Dh) scaled queries for this head.
    # k_ref/v_ref: (1, 1, S, Dh) keys/values for this head (VMEM resident).
    # wo_ref: (1, Dh, E) rows of Wo^T owned by this head;  bo_ref: (1, E) f32.
    # o_ref: (1, Tq, E) output tile (resident across the head grid axis).
    # oacc_scr: (Tq, E) f32 output-projection accumulator across heads.
    h = pl.program_id(2)
    num_heads = pl.num_programs(2)

    @pl.when(h == 0)
    def _():
        oacc_scr[...] = jnp.zeros_like(oacc_scr)

    q = q_ref[0, 0]                                   # (Tq, Dh), input dtype
    seq_len = k_ref.shape[2]
    tq, dh = q.shape
    n_chunks = seq_len // kv_chunk

    def body(c, carry):
        m_prev, l_prev, acc_prev = carry
        off = pl.multiple_of(c * kv_chunk, kv_chunk)
        k = k_ref[0, 0, pl.ds(off, kv_chunk), :]      # (Tkv, Dh)
        v = v_ref[0, 0, pl.ds(off, kv_chunk), :]      # (Tkv, Dh)
        s = jnp.einsum("qd,kd->qk", q, k,
                       preferred_element_type=jnp.float32)   # (Tq, Tkv) f32
        m_new = jnp.maximum(m_prev, jnp.max(s, axis=-1, keepdims=True))
        alpha = jnp.exp(m_prev - m_new)
        p = jnp.exp(s - m_new)
        l_new = alpha * l_prev + jnp.sum(p, axis=-1, keepdims=True)
        acc_new = alpha * acc_prev + jnp.dot(
            p.astype(v.dtype), v, preferred_element_type=jnp.float32)
        return m_new, l_new, acc_new

    m0 = jnp.full((tq, 1), -jnp.inf, jnp.float32)
    l0 = jnp.zeros((tq, 1), jnp.float32)
    a0 = jnp.zeros((tq, dh), jnp.float32)
    _, l_fin, acc_fin = lax.fori_loop(0, n_chunks, body, (m0, l0, a0))

    ctx = acc_fin * pl.reciprocal(l_fin, approx=True)         # (Tq, Dh) f32
    # Fused output projection: accumulate ctx_h @ Wo_h into the (Tq, E) slab.
    oacc_scr[...] += jnp.dot(ctx.astype(q.dtype), wo_ref[0],
                             preferred_element_type=jnp.float32)

    @pl.when(h == num_heads - 1)
    def _():
        o_ref[0] = (oacc_scr[...] + bo_ref[...]).astype(o_ref.dtype)


def _pick_tile(n, target):
    """Largest tile <= target that divides n and keeps sublane (8) alignment."""
    if n <= target:
        return n
    for t in range(target, 0, -1):
        if n % t == 0 and t % 8 == 0:
            return t
    return n


def multi_head_self_attention(x, params, *, num_heads,
                              q_tile=512, kv_chunk=256, s_tile=512):
    """x: (B, S, E). params: dict of wq,bq,wk,bk,wv,bv,wo,bo (nn.Linear layout).

    Tile guidance: sweep q_tile / kv_chunk per generation - v7x (64 MiB VMEM)
    wants the (Tq, E) f32 accumulator + resident per-head K/V kept modest;
    v5e/v6e (128 MiB) can afford larger q tiles to amortize per-step overhead.
    """
    B, S, E = x.shape
    assert E % num_heads == 0, "embed_dim must be divisible by num_heads"
    H = num_heads
    Dh = E // H
    scale = Dh ** (-0.5)
    dt = x.dtype

    # nn.Linear computes x @ W.T + b: pre-transpose once, fuse Q|K|V, fold the
    # softmax scale into Q, and lay weights out head-major (3H, E, Dh) so the
    # per-head column split happens in the BlockSpec index_map.
    wqkv_t = jnp.concatenate(
        [params["wq"].T * scale, params["wk"].T, params["wv"].T], axis=1)   # (E, 3E)
    bqkv = jnp.concatenate([params["bq"] * scale, params["bk"], params["bv"]])
    wqkv_r = wqkv_t.reshape(E, 3 * H, Dh).transpose(1, 0, 2).astype(dt)     # (3H, E, Dh)
    bqkv_r = bqkv.reshape(3 * H, 1, Dh).astype(jnp.float32)                 # (3H, 1, Dh)
    wo_r = params["wo"].T.reshape(H, Dh, E).astype(dt)                      # (H, Dh, E)
    bo = params["bo"].reshape(1, E).astype(jnp.float32)                     # (1, E)

    # ---- Pass 1: fused QKV projection into head-major (B, 3H, S, Dh). ----
    Ts = _pick_tile(S, s_tile)
    n_s = S // Ts
    qkv = pl.pallas_call(
        _qkv_proj_kernel,
        out_shape=jax.ShapeDtypeStruct((B, 3 * H, S, Dh), dt),
        grid_spec=pltpu.PrefetchScalarGridSpec(
            num_scalar_prefetch=0,
            grid=(B, n_s, 3 * H),
            in_specs=[
                pl.BlockSpec((1, Ts, E), lambda b, si, g: (b, si, 0)),   # x tile
                pl.BlockSpec((1, E, Dh), lambda b, si, g: (g, 0, 0)),    # W column blk
                pl.BlockSpec((1, 1, Dh), lambda b, si, g: (g, 0, 0)),    # bias blk
            ],
            out_specs=pl.BlockSpec((1, 1, Ts, Dh), lambda b, si, g: (b, g, si, 0)),
        ),
        compiler_params=pltpu.CompilerParams(
            dimension_semantics=("parallel", "parallel", "parallel")),
    )(x, wqkv_r, bqkv_r)

    # ---- Pass 2: flash attention + fused output projection -> (B, S, E). ----
    Tq = _pick_tile(S, q_tile)
    n_q = S // Tq
    Tkv = _pick_tile(S, kv_chunk)
    kernel = functools.partial(_flash_attn_outproj_kernel, kv_chunk=Tkv)

    return pl.pallas_call(
        kernel,
        out_shape=jax.ShapeDtypeStruct((B, S, E), dt),
        grid_spec=pltpu.PrefetchScalarGridSpec(
            num_scalar_prefetch=0,
            grid=(B, n_q, H),
            in_specs=[
                pl.BlockSpec((1, 1, Tq, Dh), lambda b, qi, h: (b, h, qi, 0)),      # Q
                pl.BlockSpec((1, 1, S, Dh), lambda b, qi, h: (b, H + h, 0, 0)),    # K
                pl.BlockSpec((1, 1, S, Dh), lambda b, qi, h: (b, 2 * H + h, 0, 0)),  # V
                pl.BlockSpec((1, Dh, E), lambda b, qi, h: (h, 0, 0)),              # Wo_h
                pl.BlockSpec((1, E), lambda b, qi, h: (0, 0)),                     # bo
            ],
            out_specs=pl.BlockSpec((1, Tq, E), lambda b, qi, h: (b, qi, 0)),
            scratch_shapes=[pltpu.VMEM((Tq, E), jnp.float32)],
        ),
        compiler_params=pltpu.CompilerParams(
            dimension_semantics=("parallel", "parallel", "arbitrary"),
            vmem_limit_bytes=48 * 1024 * 1024),
    )(qkv, qkv, qkv, wo_r, bo)


def _reference(x, params, *, num_heads):
    """Pure-JAX reference matching the PyTorch forward exactly."""
    B, S, E = x.shape
    Dh = E // num_heads
    scale = Dh ** (-0.5)
    lin = lambda a, w, b: a @ w.T + b
    Q = lin(x, params["wq"], params["bq"]).reshape(B, S, num_heads, Dh).transpose(0, 2, 1, 3)
    K = lin(x, params["wk"], params["bk"]).reshape(B, S, num_heads, Dh).transpose(0, 2, 1, 3)
    V = lin(x, params["wv"], params["bv"]).reshape(B, S, num_heads, Dh).transpose(0, 2, 1, 3)
    scores = jnp.einsum("bhqd,bhkd->bhqk", Q, K) * scale
    attn = jax.nn.softmax(scores, axis=-1)
    out = jnp.einsum("bhqk,bhkd->bhqd", attn, V)
    out = out.transpose(0, 2, 1, 3).reshape(B, S, E)
    return lin(out, params["wo"], params["bo"])


if __name__ == "__main__":
    B, S, E, H = 2, 8, 32, 4

    key = jax.random.PRNGKey(0)
    keys = jax.random.split(key, 9)
    params = {
        "wq": jax.random.normal(keys[0], (E, E), jnp.float32) * 0.1,
        "bq": jax.random.normal(keys[1], (E,), jnp.float32) * 0.1,
        "wk": jax.random.normal(keys[2], (E, E), jnp.float32) * 0.1,
        "bk": jax.random.normal(keys[3], (E,), jnp.float32) * 0.1,
        "wv": jax.random.normal(keys[4], (E, E), jnp.float32) * 0.1,
        "bv": jax.random.normal(keys[5], (E,), jnp.float32) * 0.1,
        "wo": jax.random.normal(keys[6], (E, E), jnp.float32) * 0.1,
        "bo": jax.random.normal(keys[7], (E,), jnp.float32) * 0.1,
    }
    x = jax.random.normal(keys[8], (B, S, E), jnp.float32)

    out = multi_head_self_attention(x, params, num_heads=H)
    out = jax.block_until_ready(out)

    ref = _reference(x, params, num_heads=H)
    assert out.shape == (B, S, E)
    # tolerance accommodates the EUP approximate-reciprocal softmax normalisation
    assert jnp.allclose(out, ref, atol=2e-3, rtol=2e-3), "mismatch vs reference"

    print("KERNEL_OK")
</pallas_src>

<mosaic_0001>
module attributes {stable_mosaic.version = 11 : i64} {
  func.func @_qkv_proj_kernel(%arg0: i32, %arg1: i32, %arg2: i32, %arg3: memref<1x8x32xf32, #tpu.memory_space<vmem>>, %arg4: memref<1x32x8xf32, #tpu.memory_space<vmem>>, %arg5: memref<1x1x8xf32, #tpu.memory_space<vmem>>, %arg6: memref<1x1x8x8xf32, #tpu.memory_space<vmem>>) attributes {dimension_semantics = [#tpu.dimension_semantics<parallel>, #tpu.dimension_semantics<parallel>, #tpu.dimension_semantics<parallel>], iteration_bounds = array<i64: 2, 1, 12>, scalar_prefetch = 0 : i64, scratch_operands = 0 : i64, tpu.core_type = #tpu.core_type<tc>, window_params = [{transform_indices = @transform_0, window_bounds = array<i64: 1, 8, 32>}, {transform_indices = @transform_1, window_bounds = array<i64: 1, 32, 8>}, {transform_indices = @transform_2, window_bounds = array<i64: 1, 1, 8>}, {transform_indices = @transform_3, window_bounds = array<i64: 1, 1, 8, 8>}]} {
    %c0 = arith.constant 0 : index
    %c0_0 = arith.constant 0 : index
    %c0_1 = arith.constant 0 : index
    %0 = vector.load %arg3[%c0, %c0_0, %c0_1] : memref<1x8x32xf32, #tpu.memory_space<vmem>>, vector<1x8x32xf32>
    %1 = vector.shape_cast %0 : vector<1x8x32xf32> to vector<8x32xf32>
    %c0_2 = arith.constant 0 : index
    %c0_3 = arith.constant 0 : index
    %c0_4 = arith.constant 0 : index
    %2 = vector.load %arg4[%c0_2, %c0_3, %c0_4] : memref<1x32x8xf32, #tpu.memory_space<vmem>>, vector<1x32x8xf32>
    %3 = vector.shape_cast %2 : vector<1x32x8xf32> to vector<32x8xf32>
    %cst = arith.constant dense<0.000000e+00> : vector<8x8xf32>
    %4 = tpu.matmul %1, %3, %cst {dimension_numbers = #tpu.dot_dimension_numbers<[1], [0], [0], [1], [0, 0, 1, 1], [], []>} : vector<8x32xf32>, vector<32x8xf32>, vector<8x8xf32> -> vector<8x8xf32>
    %c0_5 = arith.constant 0 : index
    %c0_6 = arith.constant 0 : index
    %c0_7 = arith.constant 0 : index
    %5 = vector.load %arg5[%c0_5, %c0_6, %c0_7] : memref<1x1x8xf32, #tpu.memory_space<vmem>>, vector<1x1x8xf32>
    %6 = vector.shape_cast %5 : vector<1x1x8xf32> to vector<1x8xf32>
    %7 = vector.broadcast %6 : vector<1x8xf32> to vector<8x8xf32>
    %8 = arith.addf %4, %7 : vector<8x8xf32>
    %c0_8 = arith.constant 0 : index
    %c0_9 = arith.constant 0 : index
    %c0_10 = arith.constant 0 : index
    %c0_11 = arith.constant 0 : index
    %9 = vector.load %arg6[%c0_8, %c0_9, %c0_10, %c0_11] : memref<1x1x8x8xf32, #tpu.memory_space<vmem>>, vector<1x1x8x8xf32>
    %10 = vector.shape_cast %9 : vector<1x1x8x8xf32> to vector<8x8xf32>
    %11 = vector.shape_cast %8 : vector<8x8xf32> to vector<1x1x8x8xf32>
    tpu.vector_store %arg6[%c0_8, %c0_9, %c0_10, %c0_11], %11 {strides = array<i32>} : memref<1x1x8x8xf32, #tpu.memory_space<vmem>>, vector<1x1x8x8xf32>,
    return
  }
  func.func @transform_0(%arg0: i32, %arg1: i32, %arg2: i32) -> (i32, i32, i32) {
    %c0_i32 = arith.constant 0 : i32
    %c0_i32_0 = arith.constant 0 : i32
    return %arg0, %arg1, %c0_i32 : i32, i32, i32
  }
  func.func @transform_1(%arg0: i32, %arg1: i32, %arg2: i32) -> (i32, i32, i32) {
    %c0_i32 = arith.constant 0 : i32
    %c0_i32_0 = arith.constant 0 : i32
    %c0_i32_1 = arith.constant 0 : i32
    return %arg2, %c0_i32, %c0_i32_0 : i32, i32, i32
  }
  func.func @transform_2(%arg0: i32, %arg1: i32, %arg2: i32) -> (i32, i32, i32) {
    %c0_i32 = arith.constant 0 : i32
    %c0_i32_0 = arith.constant 0 : i32
    %c0_i32_1 = arith.constant 0 : i32
    return %arg2, %c0_i32, %c0_i32_0 : i32, i32, i32
  }
  func.func @transform_3(%arg0: i32, %arg1: i32, %arg2: i32) -> (i32, i32, i32, i32) {
    %c0_i32 = arith.constant 0 : i32
    %c0_i32_0 = arith.constant 0 : i32
    return %arg0, %arg2, %arg1, %c0_i32 : i32, i32, i32, i32
  }
}

</mosaic_0001>

<llo_original>
// kernel: tpu_custom_call.1
$region0: #{tpu_custom_call.1}
  #allocation0 [shape = 'u32[]', space=smem, size = 0x4, offset = 0x4, fixed_abs, tag = 'smem constant byte address 0x4 - core index']
  #allocation1 [shape = 'u32[72,128]{1,0:T(1,128)}', space=vmem, size = 0x9000, scoped, tag = 'internal scratch']
  %s0 = inlined_call_operand.vmem [shape: f32[2,8,32], index: 0, kind: input, shape index: {}]
  %s1 = inlined_call_operand.vmem [shape: f32[12,32,8], index: 1, kind: input, shape index: {}]
  %s2 = inlined_call_operand.vmem [shape: f32[12,1,8], index: 2, kind: input, shape index: {}]
  %s3 = inlined_call_operand.vmem [shape: f32[2,12,8,8], index: 3, kind: output, shape index: {}]
  %s4 = sld [smem:[#allocation0]]
  $region45: #{tpu_custom_call.1} parent=0
    _
  %s6 = ssub.s32 1, %s4
  %s7 = scalar_select 0, %s6, %s4
  loop: start=0, step=1, limit=26
  $region2: #{tpu_custom_call.1} parent=0 // loop_pre_header
    _
  $region3: #{tpu_custom_call.1} parent=0 // loop_header
    %s9 = sphi 0, %s13
    %p10 = scmp.ge.s32.totalorder %s9, 26
    %s16 = sphi 0, %s35
    %s17 = sphi 0, %s31
    %s18 = sphi 0, %s27
    %s19 = sphi 0, %s16
    %s20 = sphi 0, %s17
    %s21 = sphi 0, %s18
    %s22 = sphi 0, %s19
    %s23 = sphi 0, %s20
    %s24 = sphi 0, %s21
    %s40 = sphi 0, %s42
    %s43 = sphi 0, %s40
    %s44 = sphi 0, %s43
    %s60 = sphi 0, %s44
    %s66 = sphi 0, %s68
    %s69 = sphi 0, %s66
    %s70 = sphi 0, %s69
    %s86 = sphi 0, %s70
    %s92 = sphi 0, %s94
    %s95 = sphi 0, %s92
    %s96 = sphi 0, %s95
    %s112 = sphi 0, %s96
    %s122 = sphi 0, %s124
    %s125 = sphi 0, %s122
    %s126 = sphi 0, %s125
    %s142 = sphi 0, %s126
  $region4: #{tpu_custom_call.1} parent=0 // loop_header_branch
    %12 = sbr.rel (%p10) target = $region8
  $region5: #{tpu_custom_call.1} parent=0 // loop_body
    %s14 = ssub.s32 %s9, 1
    %s15 = ssub.s32 %s9, 2
    %s25 = sadd.s32 1, %s18
    %p26 = scmp.ge.s32.totalorder %s25, 12
    %s27 = scalar_select %p26, 0, %s25
    %s28 = sadd.s32 1, %s17
    %s29 = scalar_select %p26, %s28, %s17
    %p30 = scmp.ge.s32.totalorder %s29, 1
    %s31 = scalar_select %p30, 0, %s29
    %s32 = sadd.s32 1, %s16
    %s33 = scalar_select %p30, %s32, %s16
    %p34 = scmp.ge.s32.totalorder %s33, 2
    %s35 = scalar_select %p34, 0, %s33
    %s36 = ssub.s32 %s16, %s35
    %s37 = ssub.s32 %s17, %s31
    %s38 = sor.u32 %s36, %s37
    %p39 = scmp.eq.s32.totalorder %s38, 0
    %s41 = sadd.s32 %s40, 1
    %s42 = scalar_select %p39, %s40, %s41
    %p45 = pneg %p39
    %p46 = scmp.eq.s32.totalorder %s9, 23
    %p47 = por %p45, %p46
    %p48 = scmp.ne.s32.totalorder %s40, %s43
    %p49 = scmp.eq.s32.totalorder %s9, 0
    %p50 = por %p48, %p49
    %p51 = scmp.ne.s32.totalorder %s40, %s43
    %p52 = scmp.eq.s32.totalorder %s14, 23
    %p53 = por %p51, %p52
    %p54 = scmp.ne.s32.totalorder %s43, %s44
    %p55 = scmp.eq.s32.totalorder %s14, 0
    %p56 = por %p54, %p55
    %p57 = scmp.ne.s32.totalorder %s43, %s44
    %p58 = scmp.eq.s32.totalorder %s15, 23
    %p59 = por %p57, %p58
    %p61 = scmp.ne.s32.totalorder %s44, %s60
    %p62 = scmp.eq.s32.totalorder %s15, 0
    %p63 = por %p61, %p62
    %s64 = ssub.s32 %s18, %s27
    %p65 = scmp.eq.s32.totalorder %s64, 0
    %s67 = sadd.s32 %s66, 1
    %s68 = scalar_select %p65, %s66, %s67
    %p71 = pneg %p65
    %p72 = scmp.eq.s32.totalorder %s9, 23
    %p73 = por %p71, %p72
    %p74 = scmp.ne.s32.totalorder %s66, %s69
    %p75 = scmp.eq.s32.totalorder %s9, 0
    %p76 = por %p74, %p75
    %p77 = scmp.ne.s32.totalorder %s66, %s69
    %p78 = scmp.eq.s32.totalorder %s14, 23
    %p79 = por %p77, %p78
    %p80 = scmp.ne.s32.totalorder %s69, %s70
    %p81 = scmp.eq.s32.totalorder %s14, 0
    %p82 = por %p80, %p81
    %p83 = scmp.ne.s32.totalorder %s69, %s70
    %p84 = scmp.eq.s32.totalorder %s15, 23
    %p85 = por %p83, %p84
    %p87 = scmp.ne.s32.totalorder %s70, %s86
    %p88 = scmp.eq.s32.totalorder %s15, 0
    %p89 = por %p87, %p88
    %s90 = ssub.s32 %s18, %s27
    %p91 = scmp.eq.s32.totalorder %s90, 0
    %s93 = sadd.s32 %s92, 1
    %s94 = scalar_select %p91, %s92, %s93
    %p97 = pneg %p91
    %p98 = scmp.eq.s32.totalorder %s9, 23
    %p99 = por %p97, %p98
    %p100 = scmp.ne.s32.totalorder %s92, %s95
    %p101 = scmp.eq.s32.totalorder %s9, 0
    %p102 = por %p100, %p101
    %p103 = scmp.ne.s32.totalorder %s92, %s95
    %p104 = scmp.eq.s32.totalorder %s14, 23
    %p105 = por %p103, %p104
    %p106 = scmp.ne.s32.totalorder %s95, %s96
    %p107 = scmp.eq.s32.totalorder %s14, 0
    %p108 = por %p106, %p107
    %p109 = scmp.ne.s32.totalorder %s95, %s96
    %p110 = scmp.eq.s32.totalorder %s15, 23
    %p111 = por %p109, %p110
    %p113 = scmp.ne.s32.totalorder %s96, %s112
    %p114 = scmp.eq.s32.totalorder %s15, 0
    %p115 = por %p113, %p114
    %s116 = ssub.s32 %s16, %s35
    %s117 = ssub.s32 %s18, %s27
    %s118 = sor.u32 %s116, %s117
    %s119 = ssub.s32 %s17, %s31
    %s120 = sor.u32 %s118, %s119
    %p121 = scmp.eq.s32.totalorder %s120, 0
    %s123 = sadd.s32 %s122, 1
    %s124 = scalar_select %p121, %s122, %s123
    %p127 = pneg %p121
    %p128 = scmp.eq.s32.totalorder %s9, 23
    %p129 = por %p127, %p128
    %p130 = scmp.ne.s32.totalorder %s122, %s125
    %p131 = scmp.eq.s32.totalorder %s9, 0
    %p132 = por %p130, %p131
    %p133 = scmp.ne.s32.totalorder %s122, %s125
    %p134 = scmp.eq.s32.totalorder %s14, 23
    %p135 = por %p133, %p134
    %p136 = scmp.ne.s32.totalorder %s125, %s126
    %p137 = scmp.eq.s32.totalorder %s14, 0
    %p138 = por %p136, %p137
    %p139 = scmp.ne.s32.totalorder %s125, %s126
    %p140 = scmp.eq.s32.totalorder %s15, 23
    %p141 = por %p139, %p140
    %p143 = scmp.ne.s32.totalorder %s126, %s142
    %p144 = scmp.eq.s32.totalorder %s15, 0
    %p145 = por %p143, %p144
    %p146 = scmp.le.s32.totalorder 1, %s9
    %p147 = scmp.lt.s32.totalorder %s9, 25
    %p148 = pnand %p146, %p147
    %p149 = pneg %p148
    // Predicated region
    $region9: #{tpu_custom_call.1} parent=5 // pred_check
      _
    $region10: #{tpu_custom_call.1} parent=5 // pred_check_branch
      %151 = sbr.rel (%p148) target = $region12
    $region11: #{tpu_custom_call.1} parent=5 // pred_region
      %s152 = ssub.s32 %s9, 1
    $region12: #{tpu_custom_call.1} parent=5 // pred_fallthru
      _
    %p153 = scmp.lt.s32.totalorder %s9, 24
    // Predicated region
    $region13: #{tpu_custom_call.1} parent=5 // pred_check
      %p154 = pneg %p153
    $region14: #{tpu_custom_call.1} parent=5 // pred_check_branch
      %156 = sbr.rel (%p154) target = $region16
    $region15: #{tpu_custom_call.1} parent=5 // pred_region
      // Predicated region
      $region17: #{tpu_custom_call.1} parent=15 // pred_check
        %p157 = pneg %p50
      $region18: #{tpu_custom_call.1} parent=15 // pred_check_branch
        %159 = sbr.rel (%p157) target = $region20
      $region19: #{tpu_custom_call.1} parent=15 // pred_region
        %p160 = scmp.lt.s32.totalorder %s16, 1
        %s161 = scalar_select %p160, %s16, 1
        %p162 = scmp.lt.s32.totalorder %s17, 0
        %s163 = scalar_select %p162, %s17, 0
        %s164 = sadd.s32 %s163, %s161
        %s165 = smul.addr %s164, 8
        %s166 = scalar_lea.vmem %s0, %s165
      $region20: #{tpu_custom_call.1} parent=15 // pred_fallthru
        _
      // Predicated region
      $region21: #{tpu_custom_call.1} parent=15 // pred_check
        %p167 = pneg %p76
      $region22: #{tpu_custom_call.1} parent=15 // pred_check_branch
        %169 = sbr.rel (%p167) target = $region24
      $region23: #{tpu_custom_call.1} parent=15 // pred_region
        %p170 = scmp.lt.s32.totalorder %s18, 11
        %s171 = scalar_select %p170, %s18, 11
        %s172 = smul.addr %s171, 4
        %s173 = smul.addr %s172, 8
        %s174 = scalar_lea.vmem %s1, %s173
      $region24: #{tpu_custom_call.1} parent=15 // pred_fallthru
        _
      // Predicated region
      $region25: #{tpu_custom_call.1} parent=15 // pred_check
        %p175 = pneg %p102
      $region26: #{tpu_custom_call.1} parent=15 // pred_check_branch
        %177 = sbr.rel (%p175) target = $region28
      $region27: #{tpu_custom_call.1} parent=15 // pred_region
        %p178 = scmp.lt.s32.totalorder %s18, 11
        %s179 = scalar_select %p178, %s18, 11
        %s180 = scalar_lea.vmem %s2, %s179
      $region28: #{tpu_custom_call.1} parent=15 // pred_fallthru
        _
    $region16: #{tpu_custom_call.1} parent=5 // pred_fallthru
      _
    %p181 = scmp.le.s32.totalorder 1, %s9
    %p182 = scmp.lt.s32.totalorder %s9, 25
    %p183 = pnand %p181, %p182
    %p184 = pneg %p183
    // Predicated region
    $region29: #{tpu_custom_call.1} parent=5 // pred_check
      _
    $region30: #{tpu_custom_call.1} parent=5 // pred_check_branch
      %186 = sbr.rel (%p183) target = $region32
    $region31: #{tpu_custom_call.1} parent=5 // pred_region
      %s187 = ssub.s32 %s9, 1
      %p188 = scmp.lt.s32.totalorder %s19, 1
      %s189 = scalar_select %p188, %s19, 1
      %p190 = scmp.lt.s32.totalorder %s20, 0
      %s191 = scalar_select %p190, %s20, 0
      %s192 = sadd.s32 %s191, %s189
      %s193 = smul.addr %s192, 8
      %s194 = scalar_lea.vmem %s0, %s193
      %p195 = pneg %p56
      %p196 = pneg %p53
      %p197 = scmp.lt.s32.totalorder %s21, 11
      %s198 = scalar_select %p197, %s21, 11
      %s199 = smul.addr %s198, 4
      %s200 = smul.addr %s199, 8
      %s201 = scalar_lea.vmem %s1, %s200
      %p202 = pneg %p82
      %p203 = pneg %p79
      %p204 = scmp.lt.s32.totalorder %s21, 11
      %s205 = scalar_select %p204, %s21, 11
      %s206 = scalar_lea.vmem %s2, %s205
      %p207 = pneg %p108
      %p208 = pneg %p105
      %p209 = pneg %p138
      %p210 = pneg %p135
      %p211 = scmp.lt.s32.totalorder %s19, 1
      %s212 = scalar_select %p211, %s19, 1
      %p213 = scmp.lt.s32.totalorder %s21, 11
      %s214 = scalar_select %p213, %s21, 11
      %p215 = scmp.lt.s32.totalorder %s20, 0
      %s216 = scalar_select %p215, %s20, 0
      %s217 = sadd.s32 %s216, %s214
      %s218 = smul.addr %s212, 12
      %s219 = sadd.s32 %s217, %s218
      %s220 = smul.addr %s219, 8
      %s221 = scalar_lea.vmem %s3, %s220
      %p222 = scmp.lt.s32.totalorder %s19, 1
      %s223 = scalar_select %p222, %s19, 1
      %p224 = scmp.lt.s32.totalorder %s20, 0
      %s225 = scalar_select %p224, %s20, 0
      %s226 = sadd.s32 %s225, %s223
      %s227 = smul.addr %s226, 8
      %s228 = scalar_lea.vmem %s0, %s227
      %p229 = scmp.lt.s32.totalorder %s21, 11
      %s230 = scalar_select %p229, %s21, 11
      %s231 = smul.addr %s230, 4
      %s232 = smul.addr %s231, 8
      %s233 = scalar_lea.vmem %s1, %s232
      %p234 = scmp.lt.s32.totalorder %s21, 11
      %s235 = scalar_select %p234, %s21, 11
      %s236 = scalar_lea.vmem %s2, %s235
      %p237 = scmp.lt.s32.totalorder %s19, 1
      %s238 = scalar_select %p237, %s19, 1
      %p239 = scmp.lt.s32.totalorder %s21, 11
      %s240 = scalar_select %p239, %s21, 11
      %p241 = scmp.lt.s32.totalorder %s20, 0
      %s242 = scalar_select %p241, %s20, 0
      %s243 = sadd.s32 %s242, %s240
      %s244 = smul.addr %s238, 12
      %s245 = sadd.s32 %s243, %s244
      %s246 = smul.addr %s245, 8
      %s247 = scalar_lea.vmem %s3, %s246
      %v248 = vld [vmem:[%s228] sm:$0xff]
      %v249 = vld [vmem:[%s233] sm:$0xff]
      %v250 = vld [vmem:[%s233 + $0x8] sm:$0xff]
      %v251 = vld [vmem:[%s233 + $0x10] sm:$0xff]
      %v252 = vld [vmem:[%s233 + $0x18] sm:$0xff]
      %v253 = vld [vmem:[%s236] sm:$0x1]
      %v255 = vperm.slane %v253, 0
      %vm257 = vcmask 261120
      %v259 = vsel %vm257, %v248, 0
      %261 = vmatpush.msra.mxu0 0.0
      %262 = vmatpush.msra.mxu0 0.0
      %263 = vmatpush.msra.mxu0 0.0
      %264 = vmatpush.msra.mxu0 0.0
      %265 = vmatpush.msra.mxu0 0.0
      %266 = vmatpush.msra.mxu0 0.0
      %267 = vmatpush.msra.mxu0 0.0
      %268 = vmatpush.msra.mxu0 0.0
      %269 = vmatpush.msra.mxu0 0.0
      %270 = vmatpush.msra.mxu0 0.0
      %271 = vmatpush.msra.mxu0 0.0
      %272 = vmatpush.msra.mxu0 0.0
      %273 = vmatpush.msra.mxu0 %v252
      %274 = vmatpush.msra.mxu0 %v251
      %275 = vmatpush.msra.mxu0 %v250
      %276 = vmatpush.msra.mxu0 %v249
      %277 = vmatmul.f32.gmra.mxu0 %v259
      %v278 = vpop.f32.mrf.mxu0
      %v279 = vadd.f32 %v255, %v278
      %280 = vdwg.mxu0
      %vm281 = vcmask 64512
      %282 = vst.msk [vmem:[%s247] sm:$0xff] %vm281, %v279
      %p283 = scmp.lt.s32.totalorder %s19, 1
      %s284 = scalar_select %p283, %s19, 1
      %p285 = scmp.lt.s32.totalorder %s21, 11
      %s286 = scalar_select %p285, %s21, 11
      %p287 = scmp.lt.s32.totalorder %s20, 0
      %s288 = scalar_select %p287, %s20, 0
      %s289 = sadd.s32 %s288, %s286
      %s290 = smul.addr %s284, 12
      %s291 = sadd.s32 %s289, %s290
      %s292 = smul.addr %s291, 8
      %s293 = scalar_lea.vmem %s3, %s292
      // Predicated region
      $region33: #{tpu_custom_call.1} parent=31 // pred_check
        %p294 = pneg %p135
      $region34: #{tpu_custom_call.1} parent=31 // pred_check_branch
        %296 = sbr.rel (%p294) target = $region36
      $region35: #{tpu_custom_call.1} parent=31 // pred_region
        _
      $region36: #{tpu_custom_call.1} parent=31 // pred_fallthru
        _
    $region32: #{tpu_custom_call.1} parent=5 // pred_fallthru
      _
    %p297 = scmp.le.s32.totalorder 2, %s9
    // Predicated region
    $region37: #{tpu_custom_call.1} parent=5 // pred_check
      %p298 = pneg %p297
    $region38: #{tpu_custom_call.1} parent=5 // pred_check_branch
      %300 = sbr.rel (%p298) target = $region40
    $region39: #{tpu_custom_call.1} parent=5 // pred_region
      %s301 = ssub.s32 %s9, 2
      // Predicated region
      $region41: #{tpu_custom_call.1} parent=39 // pred_check
        %p302 = pneg %p141
      $region42: #{tpu_custom_call.1} parent=39 // pred_check_branch
        %304 = sbr.rel (%p302) target = $region44
      $region43: #{tpu_custom_call.1} parent=39 // pred_region
        %p305 = scmp.lt.s32.totalorder %s22, 1
        %s306 = scalar_select %p305, %s22, 1
        %p307 = scmp.lt.s32.totalorder %s24, 11
        %s308 = scalar_select %p307, %s24, 11
        %p309 = scmp.lt.s32.totalorder %s23, 0
        %s310 = scalar_select %p309, %s23, 0
        %s311 = sadd.s32 %s310, %s308
        %s312 = smul.addr %s306, 12
        %s313 = sadd.s32 %s311, %s312
        %s314 = smul.addr %s313, 8
        %s315 = scalar_lea.vmem %s3, %s314
      $region44: #{tpu_custom_call.1} parent=39 // pred_fallthru
        _
    $region40: #{tpu_custom_call.1} parent=5 // pred_fallthru
      _
  $region6: #{tpu_custom_call.1} parent=0 // loop_footer
    %s13 = sadd.s32 1, %s9
  $region7: #{tpu_custom_call.1} parent=0 // loop_footer_branch
    %8 = sbr.rel target = $region3
  $region8: #{tpu_custom_call.1} parent=0 // loop_exit
    _

</llo_original>
